<compile_context>
chip_gen: v7x
topology: tpu7x:2x2x1
jax: 0.10.0
libtpu: 0.0.40
codegen_flags: <defaults>
</compile_context>

<pallas_src>
import functools
import math

import jax
import jax.numpy as jnp
from jax.experimental import pallas as pl
from jax.experimental.pallas import tpu as pltpu


LN_EPS = 1e-5
LANE = 128
SUBLANE = 8


def _round_up(x, m):
    return ((x + m - 1) // m) * m


def _recurrence_dtype():
    """bf16 VALUs exist on v6e/v7x -> run the angle-addition recurrence in bf16
    there (2x elements per vreg op, no per-harmonic casts).  v5e and older
    have no bf16 VPU -> keep it f32 (bf16 would still compile, just slower)."""
    try:
        kind = jax.devices()[0].device_kind.lower()
    except Exception:
        return jnp.float32
    return jnp.bfloat16 if any(t in kind for t in ("v6", "v7", "7x")) else jnp.float32


# ----------------------------------------------------------------------------
# Fused FSP (Fourier-series projection) + bias + LayerNorm kernel
# ----------------------------------------------------------------------------
def _make_fused_kernel(i_pad, o_pad, o_real, signals, rec_dtype):
    def kernel(sin1_ref, cos1_ref, w_ref, p_ref, o_ref, feat_ref):
        # --- Stage Fourier features of ALL harmonics into one bf16 VMEM slab.
        sin1_in = sin1_ref[...]                      # (tile_n, i_pad) bf16
        cos1_in = cos1_ref[...]
        feat_ref[:, 0:i_pad] = sin1_in               # harmonic 1 as-is
        feat_ref[:, i_pad:2 * i_pad] = cos1_in

        if signals > 1:
            # Angle addition builds sin((s+1)x), cos((s+1)x) on the VPU only.
            sin1 = sin1_in.astype(rec_dtype)
            cos1 = cos1_in.astype(rec_dtype)
            sin_s, cos_s = sin1, cos1
            # TODO(synk): convert to lax.fori_loop + pl.ds slab/weight slices
            # if `signals` ever grows beyond ~8 (unrolled live-range blowup).
            for s in range(1, signals):
                sin_next = sin_s * cos1 + cos_s * sin1
                cos_next = cos_s * cos1 - sin_s * sin1
                sin_s, cos_s = sin_next, cos_next
                feat_ref[:, (2 * s) * i_pad:(2 * s + 1) * i_pad] = (
                    sin_s.astype(jnp.bfloat16))
                feat_ref[:, (2 * s + 1) * i_pad:(2 * s + 2) * i_pad] = (
                    cos_s.astype(jnp.bfloat16))

        # --- ONE MXU contraction, K = 2*S*i_pad (single result drain instead
        #     of 2S small dots + 2S accumulator passes).
        y = jnp.dot(feat_ref[...], w_ref[...],
                    preferred_element_type=jnp.float32)

        p = p_ref[...]                               # (8, o_pad): rows = bias, gamma, beta
        y = y + p[0:1, :]                            # padded bias columns == 0

        # --- LayerNorm over the o_real real channels (all math f32).
        # Padded columns of y are exactly 0 (zero weight columns + zero bias),
        # so no mask is needed for the statistics; gamma is 0 in padded
        # columns so those outputs stay 0.
        inv_n = 1.0 / float(o_real)
        mean = jnp.sum(y, axis=-1, keepdims=True) * inv_n
        var = jnp.sum(y * y, axis=-1, keepdims=True) * inv_n - mean * mean
        var = jnp.maximum(var, 0.0)
        inv = jax.lax.rsqrt(var + LN_EPS)
        o_ref[...] = ((y - mean) * inv * p[1:2, :] + p[2:3, :]).astype(o_ref.dtype)

    return kernel


# ----------------------------------------------------------------------------
# Parameters (synthetic, matching Simple_FSP_Enc.__init__ shapes)
# ----------------------------------------------------------------------------
def init_params(key, inputs, outputs, signals):
    i_pad = _round_up(inputs, LANE)
    o_pad = _round_up(outputs, LANE)              # lane-dense output channels
    kw, kb = jax.random.split(key)
    fan_in = 2 * signals * inputs
    bound = 1.0 / math.sqrt(fan_in)

    w_real = jax.random.uniform(kw, (2 * signals, inputs, outputs),
                                jnp.float32, -bound, bound)
    w = jnp.zeros((2 * signals, i_pad, o_pad), jnp.float32)
    w = w.at[:, :inputs, :outputs].set(w_real)    # padded rows/cols stay 0
    w = w.reshape(2 * signals * i_pad, o_pad).astype(jnp.bfloat16)

    b_real = jax.random.uniform(kb, (outputs,), jnp.float32, -bound, bound)
    # Pack FSP bias / LN gamma / LN beta into a single (8, o_pad) slab:
    #   row 0 = bias, row 1 = gamma, row 2 = beta, rows 3..7 = padding.
    packed = jnp.zeros((SUBLANE, o_pad), jnp.float32)
    packed = packed.at[0, :outputs].set(b_real)
    packed = packed.at[1, :outputs].set(1.0)
    return {"fsp_w": w, "ln_fsp_params": packed}


# ----------------------------------------------------------------------------
# Forward: Flatten -> FSP -> LayerNorm (one fused pallas_call)
# ----------------------------------------------------------------------------
@functools.partial(jax.jit, static_argnames=("outputs", "signals"))
def simple_fsp_enc_forward(x, params, *, outputs, signals):
    n = x.shape[0]
    x_flat = x.reshape(n, -1).astype(jnp.float32)            # nn.Flatten()
    i_real = x_flat.shape[1]
    i_pad = _round_up(i_real, LANE)
    o_pad = params["fsp_w"].shape[1]
    k_dim = params["fsp_w"].shape[0]
    assert k_dim == 2 * signals * i_pad

    # Row tiling: >=2 grid steps when the batch allows it (v7x shards the
    # "parallel" axis across its 2 TensorCores), capped at 1024 rows so the
    # ~0.35us per-step overhead is tiny while the double-buffered working set
    # stays ~10 MiB (well under even v7x's scoped VMEM).
    n_sub = _round_up(max(n, 1), SUBLANE)
    tile_n = min(1024, max(SUBLANE, _round_up(pl.cdiv(n_sub, 2), SUBLANE)))
    n_pad = _round_up(n, tile_n)

    x_p = jnp.pad(x_flat, ((0, n_pad - n), (0, i_pad - i_real)))
    # Only the first harmonic is computed by XLA and shipped as bf16 (halves
    # kernel input DMA); higher harmonics are rebuilt in-kernel via angle
    # addition, so the 2*S-wide feature matrix never touches HBM.
    sin1 = jnp.sin(x_p).astype(jnp.bfloat16)
    cos1 = jnp.cos(x_p).astype(jnp.bfloat16)

    rec_dtype = _recurrence_dtype()
    kernel = _make_fused_kernel(i_pad, o_pad, outputs, signals, rec_dtype)

    flops = 2 * n_pad * k_dim * o_pad + 6 * n_pad * i_pad * max(signals - 1, 0)
    bytes_accessed = (2 * n_pad * i_pad * 2          # bf16 sin/cos tiles
                      + k_dim * o_pad * 2            # bf16 weight slab
                      + SUBLANE * o_pad * 4          # packed bias/gamma/beta
                      + n_pad * o_pad * 4)           # f32 output

    out = pl.pallas_call(
        kernel,
        out_shape=jax.ShapeDtypeStruct((n_pad, o_pad), jnp.float32),
        grid=(n_pad // tile_n,),
        in_specs=[
            pl.BlockSpec((tile_n, i_pad), lambda i: (i, 0)),    # sin(x) tile (bf16)
            pl.BlockSpec((tile_n, i_pad), lambda i: (i, 0)),    # cos(x) tile (bf16)
            # Resident bf16 weight slab (constant index_map -> DMA'd once).
            # TODO(synk): once 2*S*i_pad*o_pad*2 bytes exceeds ~8 MiB, add a K
            # grid axis marked "arbitrary" with an f32 accumulator scratch
            # instead of keeping the full slab resident (v7x: 64 MiB VMEM).
            pl.BlockSpec((k_dim, o_pad), lambda i: (0, 0)),
            pl.BlockSpec((SUBLANE, o_pad), lambda i: (0, 0)),   # bias/gamma/beta pack
        ],
        out_specs=pl.BlockSpec((tile_n, o_pad), lambda i: (i, 0)),
        scratch_shapes=[pltpu.VMEM((tile_n, k_dim), jnp.bfloat16)],  # feature slab
        compiler_params=pltpu.CompilerParams(
            dimension_semantics=("parallel",),
            vmem_limit_bytes=32 * 1024 * 1024),
        cost_estimate=pl.CostEstimate(
            flops=flops, transcendentals=n_pad, bytes_accessed=bytes_accessed),
    )(sin1, cos1, params["fsp_w"], params["ln_fsp_params"])

    return out[:n, :outputs]


if __name__ == "__main__":
    key = jax.random.PRNGKey(0)
    kx, kp = jax.random.split(key)

    # Small shapes consistent with the module: Flatten -> FSP -> LayerNorm.
    batch, seq, hidden = 2, 8, 32          # flatten: inputs = seq*hidden = 256
    outputs, signals = 32, 4               # inout = (256, 32), parameters = 4

    x = jax.random.normal(kx, (batch, seq, hidden), jnp.float32)
    params = init_params(kp, inputs=seq * hidden, outputs=outputs,
                         signals=signals)

    out = simple_fsp_enc_forward(x, params, outputs=outputs, signals=signals)
    out = jax.block_until_ready(out)

    assert out.shape == (batch, outputs), out.shape
    assert out.dtype == jnp.float32
    print("KERNEL_OK")
</pallas_src>

<mosaic_0001>
module attributes {stable_mosaic.version = 11 : i64} {
  func.func @kernel(%arg0: i32, %arg1: memref<8x256xbf16, #tpu.memory_space<vmem>>, %arg2: memref<8x256xbf16, #tpu.memory_space<vmem>>, %arg3: memref<2048x128xbf16, #tpu.memory_space<vmem>>, %arg4: memref<8x128xf32, #tpu.memory_space<vmem>>, %arg5: memref<8x128xf32, #tpu.memory_space<vmem>>, %arg6: memref<8x2048xbf16, #tpu.memory_space<vmem>>) attributes {dimension_semantics = [#tpu.dimension_semantics<parallel>], iteration_bounds = array<i64: 1>, scalar_prefetch = 0 : i64, scratch_operands = 1 : i64, tpu.core_type = #tpu.core_type<tc>, window_params = [{transform_indices = @transform_0, window_bounds = array<i64: 8, 256>}, {transform_indices = @transform_1, window_bounds = array<i64: 8, 256>}, {pipeline_mode = #tpu.pipeline_mode<synchronous>, transform_indices = @transform_2, window_bounds = array<i64: 2048, 128>}, {pipeline_mode = #tpu.pipeline_mode<synchronous>, transform_indices = @transform_3, window_bounds = array<i64: 8, 128>}, {transform_indices = @transform_4, window_bounds = array<i64: 8, 128>}]} {
    %c0 = arith.constant 0 : index
    %c0_0 = arith.constant 0 : index
    %0 = vector.load %arg1[%c0, %c0_0] : memref<8x256xbf16, #tpu.memory_space<vmem>>, vector<8x256xbf16>
    %c0_1 = arith.constant 0 : index
    %c0_2 = arith.constant 0 : index
    %1 = vector.load %arg2[%c0_1, %c0_2] : memref<8x256xbf16, #tpu.memory_space<vmem>>, vector<8x256xbf16>
    %c0_3 = arith.constant 0 : index
    %c0_4 = arith.constant 0 : index
    %2 = vector.load %arg6[%c0_3, %c0_4] : memref<8x2048xbf16, #tpu.memory_space<vmem>>, vector<8x256xbf16>
    tpu.vector_store %arg6[%c0_3, %c0_4], %0 {strides = array<i32>} : memref<8x2048xbf16, #tpu.memory_space<vmem>>, vector<8x256xbf16>,
    %c0_5 = arith.constant 0 : index
    %c256 = arith.constant 256 : index
    %3 = vector.load %arg6[%c0_5, %c256] : memref<8x2048xbf16, #tpu.memory_space<vmem>>, vector<8x256xbf16>
    tpu.vector_store %arg6[%c0_5, %c256], %1 {strides = array<i32>} : memref<8x2048xbf16, #tpu.memory_space<vmem>>, vector<8x256xbf16>,
    %4 = arith.extf %0 : vector<8x256xbf16> to vector<8x256xf32>
    %5 = arith.extf %1 : vector<8x256xbf16> to vector<8x256xf32>
    %6 = arith.mulf %4, %5 : vector<8x256xf32>
    %7 = arith.mulf %5, %4 : vector<8x256xf32>
    %8 = arith.addf %6, %7 : vector<8x256xf32>
    %9 = arith.mulf %5, %5 : vector<8x256xf32>
    %10 = arith.mulf %4, %4 : vector<8x256xf32>
    %11 = arith.subf %9, %10 : vector<8x256xf32>
    %12 = arith.truncf %8 : vector<8x256xf32> to vector<8x256xbf16>
    %c0_6 = arith.constant 0 : index
    %c512 = arith.constant 512 : index
    %13 = vector.load %arg6[%c0_6, %c512] : memref<8x2048xbf16, #tpu.memory_space<vmem>>, vector<8x256xbf16>
    tpu.vector_store %arg6[%c0_6, %c512], %12 {strides = array<i32>} : memref<8x2048xbf16, #tpu.memory_space<vmem>>, vector<8x256xbf16>,
    %14 = arith.truncf %11 : vector<8x256xf32> to vector<8x256xbf16>
    %c0_7 = arith.constant 0 : index
    %c768 = arith.constant 768 : index
    %15 = vector.load %arg6[%c0_7, %c768] : memref<8x2048xbf16, #tpu.memory_space<vmem>>, vector<8x256xbf16>
    tpu.vector_store %arg6[%c0_7, %c768], %14 {strides = array<i32>} : memref<8x2048xbf16, #tpu.memory_space<vmem>>, vector<8x256xbf16>,
    %16 = arith.mulf %8, %5 : vector<8x256xf32>
    %17 = arith.mulf %11, %4 : vector<8x256xf32>
    %18 = arith.addf %16, %17 : vector<8x256xf32>
    %19 = arith.mulf %11, %5 : vector<8x256xf32>
    %20 = arith.mulf %8, %4 : vector<8x256xf32>
    %21 = arith.subf %19, %20 : vector<8x256xf32>
    %22 = arith.truncf %18 : vector<8x256xf32> to vector<8x256xbf16>
    %c0_8 = arith.constant 0 : index
    %c1024 = arith.constant 1024 : index
    %23 = vector.load %arg6[%c0_8, %c1024] : memref<8x2048xbf16, #tpu.memory_space<vmem>>, vector<8x256xbf16>
    tpu.vector_store %arg6[%c0_8, %c1024], %22 {strides = array<i32>} : memref<8x2048xbf16, #tpu.memory_space<vmem>>, vector<8x256xbf16>,
    %24 = arith.truncf %21 : vector<8x256xf32> to vector<8x256xbf16>
    %c0_9 = arith.constant 0 : index
    %c1280 = arith.constant 1280 : index
    %25 = vector.load %arg6[%c0_9, %c1280] : memref<8x2048xbf16, #tpu.memory_space<vmem>>, vector<8x256xbf16>
    tpu.vector_store %arg6[%c0_9, %c1280], %24 {strides = array<i32>} : memref<8x2048xbf16, #tpu.memory_space<vmem>>, vector<8x256xbf16>,
    %26 = arith.mulf %18, %5 : vector<8x256xf32>
    %27 = arith.mulf %21, %4 : vector<8x256xf32>
    %28 = arith.addf %26, %27 : vector<8x256xf32>
    %29 = arith.mulf %21, %5 : vector<8x256xf32>
    %30 = arith.mulf %18, %4 : vector<8x256xf32>
    %31 = arith.subf %29, %30 : vector<8x256xf32>
    %32 = arith.truncf %28 : vector<8x256xf32> to vector<8x256xbf16>
    %c0_10 = arith.constant 0 : index
    %c1536 = arith.constant 1536 : index
    %33 = vector.load %arg6[%c0_10, %c1536] : memref<8x2048xbf16, #tpu.memory_space<vmem>>, vector<8x256xbf16>
    tpu.vector_store %arg6[%c0_10, %c1536], %32 {strides = array<i32>} : memref<8x2048xbf16, #tpu.memory_space<vmem>>, vector<8x256xbf16>,
    %34 = arith.truncf %31 : vector<8x256xf32> to vector<8x256xbf16>
    %c0_11 = arith.constant 0 : index
    %c1792 = arith.constant 1792 : index
    %35 = vector.load %arg6[%c0_11, %c1792] : memref<8x2048xbf16, #tpu.memory_space<vmem>>, vector<8x256xbf16>
    tpu.vector_store %arg6[%c0_11, %c1792], %34 {strides = array<i32>} : memref<8x2048xbf16, #tpu.memory_space<vmem>>, vector<8x256xbf16>,
    %c0_12 = arith.constant 0 : index
    %c0_13 = arith.constant 0 : index
    %36 = vector.load %arg6[%c0_12, %c0_13] : memref<8x2048xbf16, #tpu.memory_space<vmem>>, vector<8x2048xbf16>
    %c0_14 = arith.constant 0 : index
    %c0_15 = arith.constant 0 : index
    %37 = vector.load %arg3[%c0_14, %c0_15] : memref<2048x128xbf16, #tpu.memory_space<vmem>>, vector<2048x128xbf16>
    %cst = arith.constant dense<0.000000e+00> : vector<8x128xf32>
    %38 = tpu.matmul %36, %37, %cst {dimension_numbers = #tpu.dot_dimension_numbers<[1], [0], [0], [1], [0, 0, 1, 1], [], []>} : vector<8x2048xbf16>, vector<2048x128xbf16>, vector<8x128xf32> -> vector<8x128xf32>
    %c0_16 = arith.constant 0 : index
    %c0_17 = arith.constant 0 : index
    %39 = vector.load %arg4[%c0_16, %c0_17] : memref<8x128xf32, #tpu.memory_space<vmem>>, vector<8x128xf32>
    %40 = vector.extract_strided_slice %39 {offsets = [0, 0], sizes = [1, 128], strides = [1, 1]} : vector<8x128xf32> to vector<1x128xf32>
    %41 = vector.broadcast %40 : vector<1x128xf32> to vector<8x128xf32>
    %42 = arith.addf %38, %41 : vector<8x128xf32>
    %cst_18 = arith.constant dense<0.000000e+00> : vector<8xf32>
    %43 = vector.multi_reduction <add>, %42, %cst_18 [1] : vector<8x128xf32> to vector<8xf32>
    %44 = vector.shape_cast %43 : vector<8xf32> to vector<8x1xf32>
    %cst_19 = arith.constant 3.125000e-02 : f32
    %45 = vector.broadcast %cst_19 : f32 to vector<8x1xf32>
    %46 = arith.mulf %44, %45 : vector<8x1xf32>
    %47 = arith.mulf %42, %42 : vector<8x128xf32>
    %cst_20 = arith.constant dense<0.000000e+00> : vector<8xf32>
    %48 = vector.multi_reduction <add>, %47, %cst_20 [1] : vector<8x128xf32> to vector<8xf32>
    %49 = vector.shape_cast %48 : vector<8xf32> to vector<8x1xf32>
    %cst_21 = arith.constant 3.125000e-02 : f32
    %50 = vector.broadcast %cst_21 : f32 to vector<8x1xf32>
    %51 = arith.mulf %49, %50 : vector<8x1xf32>
    %52 = arith.mulf %46, %46 : vector<8x1xf32>
    %53 = arith.subf %51, %52 : vector<8x1xf32>
    %cst_22 = arith.constant 0.000000e+00 : f32
    %54 = vector.broadcast %cst_22 : f32 to vector<8x1xf32>
    %55 = arith.maximumf %53, %54 : vector<8x1xf32>
    %cst_23 = arith.constant 9.99999974E-6 : f32
    %56 = vector.broadcast %cst_23 : f32 to vector<8x1xf32>
    %57 = arith.addf %55, %56 : vector<8x1xf32>
    %58 = math.rsqrt %57 : vector<8x1xf32>
    %59 = vector.broadcast %46 : vector<8x1xf32> to vector<8x128xf32>
    %60 = arith.subf %42, %59 : vector<8x128xf32>
    %61 = vector.broadcast %58 : vector<8x1xf32> to vector<8x128xf32>
    %62 = arith.mulf %60, %61 : vector<8x128xf32>
    %63 = vector.extract_strided_slice %39 {offsets = [1, 0], sizes = [1, 128], strides = [1, 1]} : vector<8x128xf32> to vector<1x128xf32>
    %64 = vector.broadcast %63 : vector<1x128xf32> to vector<8x128xf32>
    %65 = arith.mulf %62, %64 : vector<8x128xf32>
    %66 = vector.extract_strided_slice %39 {offsets = [2, 0], sizes = [1, 128], strides = [1, 1]} : vector<8x128xf32> to vector<1x128xf32>
    %67 = vector.broadcast %66 : vector<1x128xf32> to vector<8x128xf32>
    %68 = arith.addf %65, %67 : vector<8x128xf32>
    %c0_24 = arith.constant 0 : index
    %c0_25 = arith.constant 0 : index
    %69 = vector.load %arg5[%c0_24, %c0_25] : memref<8x128xf32, #tpu.memory_space<vmem>>, vector<8x128xf32>
    tpu.vector_store %arg5[%c0_24, %c0_25], %68 {strides = array<i32>} : memref<8x128xf32, #tpu.memory_space<vmem>>, vector<8x128xf32>,
    return
  }
  func.func @transform_0(%arg0: i32) -> (i32, i32) {
    %c0_i32 = arith.constant 0 : i32
    %c0_i32_0 = arith.constant 0 : i32
    return %arg0, %c0_i32 : i32, i32
  }
  func.func @transform_1(%arg0: i32) -> (i32, i32) {
    %c0_i32 = arith.constant 0 : i32
    %c0_i32_0 = arith.constant 0 : i32
    return %arg0, %c0_i32 : i32, i32
  }
  func.func @transform_2(%arg0: i32) -> (i32, i32) {
    %c0_i32 = arith.constant 0 : i32
    %c0_i32_0 = arith.constant 0 : i32
    %c0_i32_1 = arith.constant 0 : i32
    return %c0_i32, %c0_i32_0 : i32, i32
  }
  func.func @transform_3(%arg0: i32) -> (i32, i32) {
    %c0_i32 = arith.constant 0 : i32
    %c0_i32_0 = arith.constant 0 : i32
    %c0_i32_1 = arith.constant 0 : i32
    return %c0_i32, %c0_i32_0 : i32, i32
  }
  func.func @transform_4(%arg0: i32) -> (i32, i32) {
    %c0_i32 = arith.constant 0 : i32
    %c0_i32_0 = arith.constant 0 : i32
    return %arg0, %c0_i32 : i32, i32
  }
}

</mosaic_0001>

<llo_original>
// kernel: simple_fsp_enc_forward.1
$region0: #{simple_fsp_enc_forward.1}
  #allocation0 [shape = 'u32[]', space=smem, size = 0x4, offset = 0x4, fixed_abs, tag = 'smem constant byte address 0x4 - core index']
  #allocation1 [shape = 'u32[144,128]{1,0:T(1,128)}', space=vmem, size = 0x12000, scoped, tag = 'internal scratch']
  #allocation2 [shape = 'bf16[8,2048]{1,0:T(8,128)(2,1)}', space=vmem, size = 0x8000, scoped, tag = 'scratch operand']
  %s0 = inlined_call_operand.vmem [shape: bf16[8,256], index: 0, kind: input, shape index: {}]
  %s1 = inlined_call_operand.vmem [shape: bf16[8,256], index: 1, kind: input, shape index: {}]
  %s2 = inlined_call_operand.hbm [shape: bf16[2048,128], index: 2, kind: input, shape index: {}]
  %s3 = inlined_call_operand.vmem [shape: f32[8,128], index: 3, kind: input, shape index: {}]
  %s4 = inlined_call_operand.vmem [shape: f32[8,128], index: 4, kind: output, shape index: {}]
  %s5 = sld [smem:[#allocation0]]
  $region30: #{simple_fsp_enc_forward.1} parent=0
    _
  %s7 = ssub.s32 1, %s5
  %s8 = scalar_select 0, %s7, %s5
  $region1: #{simple_fsp_enc_forward.1} parent=0
    #allocation3 [shape = 'u8[524288]{0}', space=vmem, size = 0x80000, scoped, tag = 'input window, operand 2, single buffered']
    #allocation4 [shape = 's32[1]{0}', space=sflag, size = 0x4, scoped, tag = 'scoped memory for simple_fsp_enc_forward.1']
    %9 = vsyncpa [#allocation4], 0
    // Predicated region
    $region2: #{simple_fsp_enc_forward.1} parent=1 // pred_check
      _
    $region3: #{simple_fsp_enc_forward.1} parent=1 // pred_check_branch
      %11 = sbr.rel (0) target = $region5
    $region4: #{simple_fsp_enc_forward.1} parent=1 // pred_region
      _
    $region5: #{simple_fsp_enc_forward.1} parent=1 // pred_fallthru
      _
    // Predicated region
    $region6: #{simple_fsp_enc_forward.1} parent=1 // pred_check
      _
    $region7: #{simple_fsp_enc_forward.1} parent=1 // pred_check_branch
      %13 = sbr.rel (0) target = $region9
    $region8: #{simple_fsp_enc_forward.1} parent=1 // pred_region
      _
    $region9: #{simple_fsp_enc_forward.1} parent=1 // pred_fallthru
      _
    // Predicated region
    $region10: #{simple_fsp_enc_forward.1} parent=1 // pred_check
      _
    $region11: #{simple_fsp_enc_forward.1} parent=1 // pred_check_branch
      %15 = sbr.rel (0) target = $region13
    $region12: #{simple_fsp_enc_forward.1} parent=1 // pred_region
      %s17 = ssub.s32 16384, 16384
      %18 = vsyncadd [#allocation4], %s17
      %s19 = sshll.u32 [#allocation3], 4
      %s20 = int_to_ptr.vmem [resolvable:$true] %s19
      %25 = dma.hbm_to_vmem [thread:$0]  %s2, 16384, %s20, [#allocation4], 64, 64, 4
    $region13: #{simple_fsp_enc_forward.1} parent=1 // pred_fallthru
      _
    // Predicated region
    $region14: #{simple_fsp_enc_forward.1} parent=1 // pred_check
      _
    $region15: #{simple_fsp_enc_forward.1} parent=1 // pred_check_branch
      %27 = sbr.rel (0) target = $region17
    $region16: #{simple_fsp_enc_forward.1} parent=1 // pred_region
      _
    $region17: #{simple_fsp_enc_forward.1} parent=1 // pred_fallthru
      _
    // Predicated region
    $region18: #{simple_fsp_enc_forward.1} parent=1 // pred_check
      _
    $region19: #{simple_fsp_enc_forward.1} parent=1 // pred_check_branch
      %29 = sbr.rel (0) target = $region21
    $region20: #{simple_fsp_enc_forward.1} parent=1 // pred_region
      %30 = dma.done [#allocation4], 16384
    $region21: #{simple_fsp_enc_forward.1} parent=1 // pred_fallthru
      _
    %v32 = vld [vmem:[%s0] sm:$0xff]
    %v33 = vld [vmem:[%s1] sm:$0xff]
    %34 = vst [vmem:[#allocation2] sm:$0xff] %v32
    %35 = vst [vmem:[#allocation2 + $0x8] sm:$0xff] %v33
    %v36 = vunpack.c.l.bf16 %v32
    %v37 = vunpack.c.h.bf16 %v32
    %v38 = vunpack.c.l.bf16 %v33
    %v39 = vunpack.c.h.bf16 %v33
    %v40 = vmul.f32 %v36, %v38
    %v41 = vmul.f32 %v37, %v39
    %v42 = vadd.f32 %v40, %v40
    %v43 = vadd.f32 %v41, %v41
    %v44 = vmul.f32 %v38, %v38
    %v45 = vmul.f32 %v39, %v39
    %v46 = vmul.f32 %v36, %v36
    %v47 = vmul.f32 %v37, %v37
    %v48 = vsub.f32 %v44, %v46
    %v49 = vsub.f32 %v45, %v47
    %v50 = vpack.c.bf16 %v42, %v42
    %v51 = vpack.c.bf16 %v43, %v43
    %v54 = vunpack.c.l.b16 %v50
    %v55 = vunpack.c.l.b16 %v51
    %v56 = vpack.c.b16 %v55, %v54
    %58 = vst [vmem:[#allocation2 + $0x10] sm:$0xff] %v56
    %v59 = vpack.c.bf16 %v48, %v48
    %v60 = vpack.c.bf16 %v49, %v49
    %v63 = vunpack.c.l.b16 %v59
    %v64 = vunpack.c.l.b16 %v60
    %v65 = vpack.c.b16 %v64, %v63
    %67 = vst [vmem:[#allocation2 + $0x18] sm:$0xff] %v65
    %v68 = vmul.f32 %v42, %v38
    %v69 = vmul.f32 %v43, %v39
    %v70 = vmul.f32 %v48, %v36
    %v71 = vmul.f32 %v49, %v37
    %v72 = vadd.f32 %v68, %v70
    %v73 = vadd.f32 %v69, %v71
    %v74 = vmul.f32 %v48, %v38
    %v75 = vmul.f32 %v49, %v39
    %v76 = vmul.f32 %v42, %v36
    %v77 = vmul.f32 %v43, %v37
    %v78 = vsub.f32 %v74, %v76
    %v79 = vsub.f32 %v75, %v77
    %v80 = vpack.c.bf16 %v72, %v72
    %v81 = vpack.c.bf16 %v73, %v73
    %v84 = vunpack.c.l.b16 %v80
    %v85 = vunpack.c.l.b16 %v81
    %v86 = vpack.c.b16 %v85, %v84
    %88 = vst [vmem:[#allocation2 + $0x20] sm:$0xff] %v86
    %v89 = vpack.c.bf16 %v78, %v78
    %v90 = vpack.c.bf16 %v79, %v79
    %v93 = vunpack.c.l.b16 %v89
    %v94 = vunpack.c.l.b16 %v90
    %v95 = vpack.c.b16 %v94, %v93
    %97 = vst [vmem:[#allocation2 + $0x28] sm:$0xff] %v95
    %v98 = vmul.f32 %v72, %v38
    %v99 = vmul.f32 %v73, %v39
    %v100 = vmul.f32 %v78, %v36
    %v101 = vmul.f32 %v79, %v37
    %v102 = vadd.f32 %v98, %v100
    %v103 = vadd.f32 %v99, %v101
    %v104 = vmul.f32 %v78, %v38
    %v105 = vmul.f32 %v79, %v39
    %v106 = vmul.f32 %v72, %v36
    %v107 = vmul.f32 %v73, %v37
    %v108 = vsub.f32 %v104, %v106
    %v109 = vsub.f32 %v105, %v107
    %v110 = vpack.c.bf16 %v102, %v102
    %v111 = vpack.c.bf16 %v103, %v103
    %v114 = vunpack.c.l.b16 %v110
    %v115 = vunpack.c.l.b16 %v111
    %v116 = vpack.c.b16 %v115, %v114
    %118 = vst [vmem:[#allocation2 + $0x30] sm:$0xff] %v116
    %v119 = vpack.c.bf16 %v108, %v108
    %v120 = vpack.c.bf16 %v109, %v109
    %v123 = vunpack.c.l.b16 %v119
    %v124 = vunpack.c.l.b16 %v120
    %v125 = vpack.c.b16 %v124, %v123
    %127 = vst [vmem:[#allocation2 + $0x38] sm:$0xff] %v125
    %v128 = vld [vmem:[#allocation2] sm:$0xff]
    %v129 = vld [vmem:[#allocation2 + $0x8] sm:$0xff]
    %v130 = vld [vmem:[#allocation2 + $0x10] sm:$0xff]
    %v131 = vld [vmem:[#allocation2 + $0x18] sm:$0xff]
    %v132 = vld [vmem:[#allocation2 + $0x20] sm:$0xff]
    %v133 = vld [vmem:[#allocation2 + $0x28] sm:$0xff]
    %v134 = vld [vmem:[#allocation2 + $0x30] sm:$0xff]
    %v135 = vld [vmem:[#allocation2 + $0x38] sm:$0xff]
    %v136 = vld [vmem:[#allocation3] sm:$0xf]
    %v137 = vld [vmem:[#allocation3 + $0x4] sm:$0xf]
    %v138 = vld [vmem:[#allocation3 + $0x8] sm:$0xf]
    %v139 = vld [vmem:[#allocation3 + $0xc] sm:$0xf]
    %v140 = vld [vmem:[#allocation3 + $0x10] sm:$0xf]
    %v141 = vld [vmem:[#allocation3 + $0x14] sm:$0xf]
    %v142 = vld [vmem:[#allocation3 + $0x18] sm:$0xf]
    %v143 = vld [vmem:[#allocation3 + $0x1c] sm:$0xf]
    %v144 = vld [vmem:[#allocation3 + $0x20] sm:$0xf]
    %v145 = vld [vmem:[#allocation3 + $0x24] sm:$0xf]
    %v146 = vld [vmem:[#allocation3 + $0x28] sm:$0xf]
    %v147 = vld [vmem:[#allocation3 + $0x2c] sm:$0xf]
    %v148 = vld [vmem:[#allocation3 + $0x30] sm:$0xf]
    %v149 = vld [vmem:[#allocation3 + $0x34] sm:$0xf]
    %v150 = vld [vmem:[#allocation3 + $0x38] sm:$0xf]
    %v151 = vld [vmem:[#allocation3 + $0x3c] sm:$0xf]
    %v152 = vld [vmem:[#allocation3 + $0x40] sm:$0xf]
    %v153 = vld [vmem:[#allocation3 + $0x44] sm:$0xf]
    %v154 = vld [vmem:[#allocation3 + $0x48] sm:$0xf]
    %v155 = vld [vmem:[#allocation3 + $0x4c] sm:$0xf]
    %v156 = vld [vmem:[#allocation3 + $0x50] sm:$0xf]
    %v157 = vld [vmem:[#allocation3 + $0x54] sm:$0xf]
    %v158 = vld [vmem:[#allocation3 + $0x58] sm:$0xf]
    %v159 = vld [vmem:[#allocation3 + $0x5c] sm:$0xf]
    %v160 = vld [vmem:[#allocation3 + $0x60] sm:$0xf]
    %v161 = vld [vmem:[#allocation3 + $0x64] sm:$0xf]
    %v162 = vld [vmem:[#allocation3 + $0x68] sm:$0xf]
    %v163 = vld [vmem:[#allocation3 + $0x6c] sm:$0xf]
    %v164 = vld [vmem:[#allocation3 + $0x70] sm:$0xf]
    %v165 = vld [vmem:[#allocation3 + $0x74] sm:$0xf]
    %v166 = vld [vmem:[#allocation3 + $0x78] sm:$0xf]
    %v167 = vld [vmem:[#allocation3 + $0x7c] sm:$0xf]
    %v168 = vld [vmem:[#allocation3 + $0x80] sm:$0xf]
    %v169 = vld [vmem:[#allocation3 + $0x84] sm:$0xf]
    %v170 = vld [vmem:[#allocation3 + $0x88] sm:$0xf]
    %v171 = vld [vmem:[#allocation3 + $0x8c] sm:$0xf]
    %v172 = vld [vmem:[#allocation3 + $0x90] sm:$0xf]
    %v173 = vld [vmem:[#allocation3 + $0x94] sm:$0xf]
    %v174 = vld [vmem:[#allocation3 + $0x98] sm:$0xf]
    %v175 = vld [vmem:[#allocation3 + $0x9c] sm:$0xf]
    %v176 = vld [vmem:[#allocation3 + $0xa0] sm:$0xf]
    %v177 = vld [vmem:[#allocation3 + $0xa4] sm:$0xf]
    %v178 = vld [vmem:[#allocation3 + $0xa8] sm:$0xf]
    %v179 = vld [vmem:[#allocation3 + $0xac] sm:$0xf]
    %v180 = vld [vmem:[#allocation3 + $0xb0] sm:$0xf]
    %v181 = vld [vmem:[#allocation3 + $0xb4] sm:$0xf]
    %v182 = vld [vmem:[#allocation3 + $0xb8] sm:$0xf]
    %v183 = vld [vmem:[#allocation3 + $0xbc] sm:$0xf]
    %v184 = vld [vmem:[#allocation3 + $0xc0] sm:$0xf]
    %v185 = vld [vmem:[#allocation3 + $0xc4] sm:$0xf]
    %v186 = vld [vmem:[#allocation3 + $0xc8] sm:$0xf]
    %v187 = vld [vmem:[#allocation3 + $0xcc] sm:$0xf]
    %v188 = vld [vmem:[#allocation3 + $0xd0] sm:$0xf]
    %v189 = vld [vmem:[#allocation3 + $0xd4] sm:$0xf]
    %v190 = vld [vmem:[#allocation3 + $0xd8] sm:$0xf]
    %v191 = vld [vmem:[#allocation3 + $0xdc] sm:$0xf]
    %v192 = vld [vmem:[#allocation3 + $0xe0] sm:$0xf]
    %v193 = vld [vmem:[#allocation3 + $0xe4] sm:$0xf]
    %v194 = vld [vmem:[#allocation3 + $0xe8] sm:$0xf]
    %v195 = vld [vmem:[#allocation3 + $0xec] sm:$0xf]
    %v196 = vld [vmem:[#allocation3 + $0xf0] sm:$0xf]
    %v197 = vld [vmem:[#allocation3 + $0xf4] sm:$0xf]
    %v198 = vld [vmem:[#allocation3 + $0xf8] sm:$0xf]
    %v199 = vld [vmem:[#allocation3 + $0xfc] sm:$0xf]
    %v200 = vld [vmem:[#allocation3 + $0x100] sm:$0xf]
    %v201 = vld [vmem:[#allocation3 + $0x104] sm:$0xf]
    %v202 = vld [vmem:[#allocation3 + $0x108] sm:$0xf]
    %v203 = vld [vmem:[#allocation3 + $0x10c] sm:$0xf]
    %v204 = vld [vmem:[#allocation3 + $0x110] sm:$0xf]
    %v205 = vld [vmem:[#allocation3 + $0x114] sm:$0xf]
    %v206 = vld [vmem:[#allocation3 + $0x118] sm:$0xf]
    %v207 = vld [vmem:[#allocation3 + $0x11c] sm:$0xf]
    %v208 = vld [vmem:[#allocation3 + $0x120] sm:$0xf]
    %v209 = vld [vmem:[#allocation3 + $0x124] sm:$0xf]
    %v210 = vld [vmem:[#allocation3 + $0x128] sm:$0xf]
    %v211 = vld [vmem:[#allocation3 + $0x12c] sm:$0xf]
    %v212 = vld [vmem:[#allocation3 + $0x130] sm:$0xf]
    %v213 = vld [vmem:[#allocation3 + $0x134] sm:$0xf]
    %v214 = vld [vmem:[#allocation3 + $0x138] sm:$0xf]
    %v215 = vld [vmem:[#allocation3 + $0x13c] sm:$0xf]
    %v216 = vld [vmem:[#allocation3 + $0x140] sm:$0xf]
    %v217 = vld [vmem:[#allocation3 + $0x144] sm:$0xf]
    %v218 = vld [vmem:[#allocation3 + $0x148] sm:$0xf]
    %v219 = vld [vmem:[#allocation3 + $0x14c] sm:$0xf]
    %v220 = vld [vmem:[#allocation3 + $0x150] sm:$0xf]
    %v221 = vld [vmem:[#allocation3 + $0x154] sm:$0xf]
    %v222 = vld [vmem:[#allocation3 + $0x158] sm:$0xf]
    %v223 = vld [vmem:[#allocation3 + $0x15c] sm:$0xf]
    %v224 = vld [vmem:[#allocation3 + $0x160] sm:$0xf]
    %v225 = vld [vmem:[#allocation3 + $0x164] sm:$0xf]
    %v226 = vld [vmem:[#allocation3 + $0x168] sm:$0xf]
    %v227 = vld [vmem:[#allocation3 + $0x16c] sm:$0xf]
    %v228 = vld [vmem:[#allocation3 + $0x170] sm:$0xf]
    %v229 = vld [vmem:[#allocation3 + $0x174] sm:$0xf]
    %v230 = vld [vmem:[#allocation3 + $0x178] sm:$0xf]
    %v231 = vld [vmem:[#allocation3 + $0x17c] sm:$0xf]
    %v232 = vld [vmem:[#allocation3 + $0x180] sm:$0xf]
    %v233 = vld [vmem:[#allocation3 + $0x184] sm:$0xf]
    %v234 = vld [vmem:[#allocation3 + $0x188] sm:$0xf]
    %v235 = vld [vmem:[#allocation3 + $0x18c] sm:$0xf]
    %v236 = vld [vmem:[#allocation3 + $0x190] sm:$0xf]
    %v237 = vld [vmem:[#allocation3 + $0x194] sm:$0xf]
    %v238 = vld [vmem:[#allocation3 + $0x198] sm:$0xf]
    %v239 = vld [vmem:[#allocation3 + $0x19c] sm:$0xf]
    %v240 = vld [vmem:[#allocation3 + $0x1a0] sm:$0xf]
    %v241 = vld [vmem:[#allocation3 + $0x1a4] sm:$0xf]
    %v242 = vld [vmem:[#allocation3 + $0x1a8] sm:$0xf]
    %v243 = vld [vmem:[#allocation3 + $0x1ac] sm:$0xf]
    %v244 = vld [vmem:[#allocation3 + $0x1b0] sm:$0xf]
    %v245 = vld [vmem:[#allocation3 + $0x1b4] sm:$0xf]
    %v246 = vld [vmem:[#allocation3 + $0x1b8] sm:$0xf]
    %v247 = vld [vmem:[#allocation3 + $0x1bc] sm:$0xf]
    %v248 = vld [vmem:[#allocation3 + $0x1c0] sm:$0xf]
    %v249 = vld [vmem:[#allocation3 + $0x1c4] sm:$0xf]
    %v250 = vld [vmem:[#allocation3 + $0x1c8] sm:$0xf]
    %v251 = vld [vmem:[#allocation3 + $0x1cc] sm:$0xf]
    %v252 = vld [vmem:[#allocation3 + $0x1d0] sm:$0xf]
    %v253 = vld [vmem:[#allocation3 + $0x1d4] sm:$0xf]
    %v254 = vld [vmem:[#allocation3 + $0x1d8] sm:$0xf]
    %v255 = vld [vmem:[#allocation3 + $0x1dc] sm:$0xf]
    %v256 = vld [vmem:[#allocation3 + $0x1e0] sm:$0xf]
    %v257 = vld [vmem:[#allocation3 + $0x1e4] sm:$0xf]
    %v258 = vld [vmem:[#allocation3 + $0x1e8] sm:$0xf]
    %v259 = vld [vmem:[#allocation3 + $0x1ec] sm:$0xf]
    %v260 = vld [vmem:[#allocation3 + $0x1f0] sm:$0xf]
    %v261 = vld [vmem:[#allocation3 + $0x1f4] sm:$0xf]
    %v262 = vld [vmem:[#allocation3 + $0x1f8] sm:$0xf]
    %v263 = vld [vmem:[#allocation3 + $0x1fc] sm:$0xf]
    %v264 = vld [vmem:[#allocation3 + $0x200] sm:$0xf]
    %v265 = vld [vmem:[#allocation3 + $0x204] sm:$0xf]
    %v266 = vld [vmem:[#allocation3 + $0x208] sm:$0xf]
    %v267 = vld [vmem:[#allocation3 + $0x20c] sm:$0xf]
    %v268 = vld [vmem:[#allocation3 + $0x210] sm:$0xf]
    %v269 = vld [vmem:[#allocation3 + $0x214] sm:$0xf]
    %v270 = vld [vmem:[#allocation3 + $0x218] sm:$0xf]
    %v271 = vld [vmem:[#allocation3 + $0x21c] sm:$0xf]
    %v272 = vld [vmem:[#allocation3 + $0x220] sm:$0xf]
    %v273 = vld [vmem:[#allocation3 + $0x224] sm:$0xf]
    %v274 = vld [vmem:[#allocation3 + $0x228] sm:$0xf]
    %v275 = vld [vmem:[#allocation3 + $0x22c] sm:$0xf]
    %v276 = vld [vmem:[#allocation3 + $0x230] sm:$0xf]
    %v277 = vld [vmem:[#allocation3 + $0x234] sm:$0xf]
    %v278 = vld [vmem:[#allocation3 + $0x238] sm:$0xf]
    %v279 = vld [vmem:[#allocation3 + $0x23c] sm:$0xf]
    %v280 = vld [vmem:[#allocation3 + $0x240] sm:$0xf]
    %v281 = vld [vmem:[#allocation3 + $0x244] sm:$0xf]
    %v282 = vld [vmem:[#allocation3 + $0x248] sm:$0xf]
    %v283 = vld [vmem:[#allocation3 + $0x24c] sm:$0xf]
    %v284 = vld [vmem:[#allocation3 + $0x250] sm:$0xf]
    %v285 = vld [vmem:[#allocation3 + $0x254] sm:$0xf]
    %v286 = vld [vmem:[#allocation3 + $0x258] sm:$0xf]
    %v287 = vld [vmem:[#allocation3 + $0x25c] sm:$0xf]
    %v288 = vld [vmem:[#allocation3 + $0x260] sm:$0xf]
    %v289 = vld [vmem:[#allocation3 + $0x264] sm:$0xf]
    %v290 = vld [vmem:[#allocation3 + $0x268] sm:$0xf]
    %v291 = vld [vmem:[#allocation3 + $0x26c] sm:$0xf]
    %v292 = vld [vmem:[#allocation3 + $0x270] sm:$0xf]
    %v293 = vld [vmem:[#allocation3 + $0x274] sm:$0xf]
    %v294 = vld [vmem:[#allocation3 + $0x278] sm:$0xf]
    %v295 = vld [vmem:[#allocation3 + $0x27c] sm:$0xf]
    %v296 = vld [vmem:[#allocation3 + $0x280] sm:$0xf]
    %v297 = vld [vmem:[#allocation3 + $0x284] sm:$0xf]
    %v298 = vld [vmem:[#allocation3 + $0x288] sm:$0xf]
    %v299 = vld [vmem:[#allocation3 + $0x28c] sm:$0xf]
    %v300 = vld [vmem:[#allocation3 + $0x290] sm:$0xf]
    %v301 = vld [vmem:[#allocation3 + $0x294] sm:$0xf]
    %v302 = vld [vmem:[#allocation3 + $0x298] sm:$0xf]
    %v303 = vld [vmem:[#allocation3 + $0x29c] sm:$0xf]
    %v304 = vld [vmem:[#allocation3 + $0x2a0] sm:$0xf]
    %v305 = vld [vmem:[#allocation3 + $0x2a4] sm:$0xf]
    %v306 = vld [vmem:[#allocation3 + $0x2a8] sm:$0xf]
    %v307 = vld [vmem:[#allocation3 + $0x2ac] sm:$0xf]
    %v308 = vld [vmem:[#allocation3 + $0x2b0] sm:$0xf]
    %v309 = vld [vmem:[#allocation3 + $0x2b4] sm:$0xf]
    %v310 = vld [vmem:[#allocation3 + $0x2b8] sm:$0xf]
    %v311 = vld [vmem:[#allocation3 + $0x2bc] sm:$0xf]
    %v312 = vld [vmem:[#allocation3 + $0x2c0] sm:$0xf]
    %v313 = vld [vmem:[#allocation3 + $0x2c4] sm:$0xf]
    %v314 = vld [vmem:[#allocation3 + $0x2c8] sm:$0xf]
    %v315 = vld [vmem:[#allocation3 + $0x2cc] sm:$0xf]
    %v316 = vld [vmem:[#allocation3 + $0x2d0] sm:$0xf]
    %v317 = vld [vmem:[#allocation3 + $0x2d4] sm:$0xf]
    %v318 = vld [vmem:[#allocation3 + $0x2d8] sm:$0xf]
    %v319 = vld [vmem:[#allocation3 + $0x2dc] sm:$0xf]
    %v320 = vld [vmem:[#allocation3 + $0x2e0] sm:$0xf]
    %v321 = vld [vmem:[#allocation3 + $0x2e4] sm:$0xf]
    %v322 = vld [vmem:[#allocation3 + $0x2e8] sm:$0xf]
    %v323 = vld [vmem:[#allocation3 + $0x2ec] sm:$0xf]
    %v324 = vld [vmem:[#allocation3 + $0x2f0] sm:$0xf]
    %v325 = vld [vmem:[#allocation3 + $0x2f4] sm:$0xf]
    %v326 = vld [vmem:[#allocation3 + $0x2f8] sm:$0xf]
    %v327 = vld [vmem:[#allocation3 + $0x2fc] sm:$0xf]
    %v328 = vld [vmem:[#allocation3 + $0x300] sm:$0xf]
    %v329 = vld [vmem:[#allocation3 + $0x304] sm:$0xf]
    %v330 = vld [vmem:[#allocation3 + $0x308] sm:$0xf]
    %v331 = vld [vmem:[#allocation3 + $0x30c] sm:$0xf]
    %v332 = vld [vmem:[#allocation3 + $0x310] sm:$0xf]
    %v333 = vld [vmem:[#allocation3 + $0x314] sm:$0xf]
    %v334 = vld [vmem:[#allocation3 + $0x318] sm:$0xf]
    %v335 = vld [vmem:[#allocation3 + $0x31c] sm:$0xf]
    %v336 = vld [vmem:[#allocation3 + $0x320] sm:$0xf]
    %v337 = vld [vmem:[#allocation3 + $0x324] sm:$0xf]
    %v338 = vld [vmem:[#allocation3 + $0x328] sm:$0xf]
    %v339 = vld [vmem:[#allocation3 + $0x32c] sm:$0xf]
    %v340 = vld [vmem:[#allocation3 + $0x330] sm:$0xf]
    %v341 = vld [vmem:[#allocation3 + $0x334] sm:$0xf]
    %v342 = vld [vmem:[#allocation3 + $0x338] sm:$0xf]
    %v343 = vld [vmem:[#allocation3 + $0x33c] sm:$0xf]
    %v344 = vld [vmem:[#allocation3 + $0x340] sm:$0xf]
    %v345 = vld [vmem:[#allocation3 + $0x344] sm:$0xf]
    %v346 = vld [vmem:[#allocation3 + $0x348] sm:$0xf]
    %v347 = vld [vmem:[#allocation3 + $0x34c] sm:$0xf]
    %v348 = vld [vmem:[#allocation3 + $0x350] sm:$0xf]
    %v349 = vld [vmem:[#allocation3 + $0x354] sm:$0xf]
    %v350 = vld [vmem:[#allocation3 + $0x358] sm:$0xf]
    %v351 = vld [vmem:[#allocation3 + $0x35c] sm:$0xf]
    %v352 = vld [vmem:[#allocation3 + $0x360] sm:$0xf]
    %v353 = vld [vmem:[#allocation3 + $0x364] sm:$0xf]
    %v354 = vld [vmem:[#allocation3 + $0x368] sm:$0xf]
    %v355 = vld [vmem:[#allocation3 + $0x36c] sm:$0xf]
    %v356 = vld [vmem:[#allocation3 + $0x370] sm:$0xf]
    %v357 = vld [vmem:[#allocation3 + $0x374] sm:$0xf]
    %v358 = vld [vmem:[#allocation3 + $0x378] sm:$0xf]
    %v359 = vld [vmem:[#allocation3 + $0x37c] sm:$0xf]
    %v360 = vld [vmem:[#allocation3 + $0x380] sm:$0xf]
    %v361 = vld [vmem:[#allocation3 + $0x384] sm:$0xf]
    %v362 = vld [vmem:[#allocation3 + $0x388] sm:$0xf]
    %v363 = vld [vmem:[#allocation3 + $0x38c] sm:$0xf]
    %v364 = vld [vmem:[#allocation3 + $0x390] sm:$0xf]
    %v365 = vld [vmem:[#allocation3 + $0x394] sm:$0xf]
    %v366 = vld [vmem:[#allocation3 + $0x398] sm:$0xf]
    %v367 = vld [vmem:[#allocation3 + $0x39c] sm:$0xf]
    %v368 = vld [vmem:[#allocation3 + $0x3a0] sm:$0xf]
    %v369 = vld [vmem:[#allocation3 + $0x3a4] sm:$0xf]
    %v370 = vld [vmem:[#allocation3 + $0x3a8] sm:$0xf]
    %v371 = vld [vmem:[#allocation3 + $0x3ac] sm:$0xf]
    %v372 = vld [vmem:[#allocation3 + $0x3b0] sm:$0xf]
    %v373 = vld [vmem:[#allocation3 + $0x3b4] sm:$0xf]
    %v374 = vld [vmem:[#allocation3 + $0x3b8] sm:$0xf]
    %v375 = vld [vmem:[#allocation3 + $0x3bc] sm:$0xf]
    %v376 = vld [vmem:[#allocation3 + $0x3c0] sm:$0xf]
    %v377 = vld [vmem:[#allocation3 + $0x3c4] sm:$0xf]
    %v378 = vld [vmem:[#allocation3 + $0x3c8] sm:$0xf]
    %v379 = vld [vmem:[#allocation3 + $0x3cc] sm:$0xf]
    %v380 = vld [vmem:[#allocation3 + $0x3d0] sm:$0xf]
    %v381 = vld [vmem:[#allocation3 + $0x3d4] sm:$0xf]
    %v382 = vld [vmem:[#allocation3 + $0x3d8] sm:$0xf]
    %v383 = vld [vmem:[#allocation3 + $0x3dc] sm:$0xf]
    %v384 = vld [vmem:[#allocation3 + $0x3e0] sm:$0xf]
    %v385 = vld [vmem:[#allocation3 + $0x3e4] sm:$0xf]
    %v386 = vld [vmem:[#allocation3 + $0x3e8] sm:$0xf]
    %v387 = vld [vmem:[#allocation3 + $0x3ec] sm:$0xf]
    %v388 = vld [vmem:[#allocation3 + $0x3f0] sm:$0xf]
    %v389 = vld [vmem:[#allocation3 + $0x3f4] sm:$0xf]
    %v390 = vld [vmem:[#allocation3 + $0x3f8] sm:$0xf]
    %v391 = vld [vmem:[#allocation3 + $0x3fc] sm:$0xf]
    %v392 = vld [vmem:[%s3] sm:$0xff]
    %v393 = vlaneseq
    %v394 = vshrl.u32 %v393, 7
    %v395 = vsub.s32 0, %v394
    %v396 = vrot.slane %v392, %v395
    %v405 = vunpack.c.l.b16 %v128
    %v406 = vunpack.c.h.b16 %v128
    %v407 = vunpack.c.l.b16 %v129
    %v408 = vunpack.c.h.b16 %v129
    %v409 = vunpack.c.l.b16 %v130
    %v410 = vunpack.c.h.b16 %v130
    %v411 = vunpack.c.l.b16 %v131
    %v412 = vunpack.c.h.b16 %v131
    %v413 = vunpack.c.l.b16 %v132
    %v414 = vunpack.c.h.b16 %v132
    %v415 = vunpack.c.l.b16 %v133
    %v416 = vunpack.c.h.b16 %v133
    %v417 = vunpack.c.l.b16 %v134
    %v418 = vunpack.c.h.b16 %v134
    %v419 = vunpack.c.l.b16 %v135
    %v420 = vunpack.c.h.b16 %v135
    %v421 = vpack.c.b16 %v405, %v405
    %v422 = vpack.c.b16 %v406, %v406
    %v423 = vpack.c.b16 %v407, %v407
    %v424 = vpack.c.b16 %v408, %v408
    %v425 = vpack.c.b16 %v409, %v409
    %v426 = vpack.c.b16 %v410, %v410
    %v427 = vpack.c.b16 %v411, %v411
    %v428 = vpack.c.b16 %v412, %v412
    %v429 = vpack.c.b16 %v413, %v413
    %v430 = vpack.c.b16 %v414, %v414
    %v431 = vpack.c.b16 %v415, %v415
    %v432 = vpack.c.b16 %v416, %v416
    %v433 = vpack.c.b16 %v417, %v417
    %v434 = vpack.c.b16 %v418, %v418
    %v435 = vpack.c.b16 %v419, %v419
    %v436 = vpack.c.b16 %v420, %v420
    %v709 = vunpack.c.l.b16 %v136
    %v710 = vunpack.c.l.b16 %v137
    %v711 = vunpack.c.l.b16 %v138
    %v712 = vunpack.c.l.b16 %v139
    %v713 = vunpack.c.l.b16 %v140
    %v714 = vunpack.c.l.b16 %v141
    %v715 = vunpack.c.l.b16 %v142
    %v716 = vunpack.c.l.b16 %v143
    %v717 = vunpack.c.l.b16 %v144
    %v718 = vunpack.c.l.b16 %v145
    %v719 = vunpack.c.l.b16 %v146
    %v720 = vunpack.c.l.b16 %v147
    %v721 = vunpack.c.l.b16 %v148
    %v722 = vunpack.c.l.b16 %v149
    %v723 = vunpack.c.l.b16 %v150
    %v724 = vunpack.c.l.b16 %v151
    %v725 = vunpack.c.l.b16 %v152
    %v726 = vunpack.c.l.b16 %v153
    %v727 = vunpack.c.l.b16 %v154
    %v728 = vunpack.c.l.b16 %v155
    %v729 = vunpack.c.l.b16 %v156
    %v730 = vunpack.c.l.b16 %v157
    %v731 = vunpack.c.l.b16 %v158
    %v732 = vunpack.c.l.b16 %v159
    %v733 = vunpack.c.l.b16 %v160
    %v734 = vunpack.c.l.b16 %v161
    %v735 = vunpack.c.l.b16 %v162
    %v736 = vunpack.c.l.b16 %v163
    %v737 = vunpack.c.l.b16 %v164
    %v738 = vunpack.c.l.b16 %v165
    %v739 = vunpack.c.l.b16 %v166
    %v740 = vunpack.c.l.b16 %v167
    %v741 = vunpack.c.l.b16 %v168
    %v742 = vunpack.c.l.b16 %v169
    %v743 = vunpack.c.l.b16 %v170
    %v744 = vunpack.c.l.b16 %v171
    %v745 = vunpack.c.l.b16 %v172
    %v746 = vunpack.c.l.b16 %v173
    %v747 = vunpack.c.l.b16 %v174
    %v748 = vunpack.c.l.b16 %v175
    %v749 = vunpack.c.l.b16 %v176
    %v750 = vunpack.c.l.b16 %v177
    %v751 = vunpack.c.l.b16 %v178
    %v752 = vunpack.c.l.b16 %v179
    %v753 = vunpack.c.l.b16 %v180
    %v754 = vunpack.c.l.b16 %v181
    %v755 = vunpack.c.l.b16 %v182
    %v756 = vunpack.c.l.b16 %v183
    %v757 = vunpack.c.l.b16 %v184
    %v758 = vunpack.c.l.b16 %v185
    %v759 = vunpack.c.l.b16 %v186
    %v760 = vunpack.c.l.b16 %v187
    %v761 = vunpack.c.l.b16 %v188
    %v762 = vunpack.c.l.b16 %v189
    %v763 = vunpack.c.l.b16 %v190
    %v764 = vunpack.c.l.b16 %v191
    %v765 = vunpack.c.l.b16 %v192
    %v766 = vunpack.c.l.b16 %v193
    %v767 = vunpack.c.l.b16 %v194
    %v768 = vunpack.c.l.b16 %v195
    %v769 = vunpack.c.l.b16 %v196
    %v770 = vunpack.c.l.b16 %v197
    %v771 = vunpack.c.l.b16 %v198
    %v772 = vunpack.c.l.b16 %v199
    %v773 = vunpack.c.l.b16 %v200
    %v774 = vunpack.c.l.b16 %v201
    %v775 = vunpack.c.l.b16 %v202
    %v776 = vunpack.c.l.b16 %v203
    %v777 = vunpack.c.l.b16 %v204
    %v778 = vunpack.c.l.b16 %v205
    %v779 = vunpack.c.l.b16 %v206
    %v780 = vunpack.c.l.b16 %v207
    %v781 = vunpack.c.l.b16 %v208
    %v782 = vunpack.c.l.b16 %v209
    %v783 = vunpack.c.l.b16 %v210
    %v784 = vunpack.c.l.b16 %v211
    %v785 = vunpack.c.l.b16 %v212
    %v786 = vunpack.c.l.b16 %v213
    %v787 = vunpack.c.l.b16 %v214
    %v788 = vunpack.c.l.b16 %v215
    %v789 = vunpack.c.l.b16 %v216
    %v790 = vunpack.c.l.b16 %v217
    %v791 = vunpack.c.l.b16 %v218
    %v792 = vunpack.c.l.b16 %v219
    %v793 = vunpack.c.l.b16 %v220
    %v794 = vunpack.c.l.b16 %v221
    %v795 = vunpack.c.l.b16 %v222
    %v796 = vunpack.c.l.b16 %v223
    %v797 = vunpack.c.l.b16 %v224
    %v798 = vunpack.c.l.b16 %v225
    %v799 = vunpack.c.l.b16 %v226
    %v800 = vunpack.c.l.b16 %v227
    %v801 = vunpack.c.l.b16 %v228
    %v802 = vunpack.c.l.b16 %v229
    %v803 = vunpack.c.l.b16 %v230
    %v804 = vunpack.c.l.b16 %v231
    %v805 = vunpack.c.l.b16 %v232
    %v806 = vunpack.c.l.b16 %v233
    %v807 = vunpack.c.l.b16 %v234
    %v808 = vunpack.c.l.b16 %v235
    %v809 = vunpack.c.l.b16 %v236
    %v810 = vunpack.c.l.b16 %v237
    %v811 = vunpack.c.l.b16 %v238
    %v812 = vunpack.c.l.b16 %v239
    %v813 = vunpack.c.l.b16 %v240
    %v814 = vunpack.c.l.b16 %v241
    %v815 = vunpack.c.l.b16 %v242
    %v816 = vunpack.c.l.b16 %v243
    %v817 = vunpack.c.l.b16 %v244
    %v818 = vunpack.c.l.b16 %v245
    %v819 = vunpack.c.l.b16 %v246
    %v820 = vunpack.c.l.b16 %v247
    %v821 = vunpack.c.l.b16 %v248
    %v822 = vunpack.c.l.b16 %v249
    %v823 = vunpack.c.l.b16 %v250
    %v824 = vunpack.c.l.b16 %v251
    %v825 = vunpack.c.l.b16 %v252
    %v826 = vunpack.c.l.b16 %v253
    %v827 = vunpack.c.l.b16 %v254
    %v828 = vunpack.c.l.b16 %v255
    %v829 = vunpack.c.l.b16 %v256
    %v830 = vunpack.c.l.b16 %v257
    %v831 = vunpack.c.l.b16 %v258
    %v832 = vunpack.c.l.b16 %v259
    %v833 = vunpack.c.l.b16 %v260
    %v834 = vunpack.c.l.b16 %v261
    %v835 = vunpack.c.l.b16 %v262
    %v836 = vunpack.c.l.b16 %v263
    %v837 = vunpack.c.l.b16 %v264
    %v838 = vunpack.c.l.b16 %v265
    %v839 = vunpack.c.l.b16 %v266
    %v840 = vunpack.c.l.b16 %v267
    %v841 = vunpack.c.l.b16 %v268
    %v842 = vunpack.c.l.b16 %v269
    %v843 = vunpack.c.l.b16 %v270
    %v844 = vunpack.c.l.b16 %v271
    %v845 = vunpack.c.l.b16 %v272
    %v846 = vunpack.c.l.b16 %v273
    %v847 = vunpack.c.l.b16 %v274
    %v848 = vunpack.c.l.b16 %v275
    %v849 = vunpack.c.l.b16 %v276
    %v850 = vunpack.c.l.b16 %v277
    %v851 = vunpack.c.l.b16 %v278
    %v852 = vunpack.c.l.b16 %v279
    %v853 = vunpack.c.l.b16 %v280
    %v854 = vunpack.c.l.b16 %v281
    %v855 = vunpack.c.l.b16 %v282
    %v856 = vunpack.c.l.b16 %v283
    %v857 = vunpack.c.l.b16 %v284
    %v858 = vunpack.c.l.b16 %v285
    %v859 = vunpack.c.l.b16 %v286
    %v860 = vunpack.c.l.b16 %v287
    %v861 = vunpack.c.l.b16 %v288
    %v862 = vunpack.c.l.b16 %v289
    %v863 = vunpack.c.l.b16 %v290
    %v864 = vunpack.c.l.b16 %v291
    %v865 = vunpack.c.l.b16 %v292
    %v866 = vunpack.c.l.b16 %v293
    %v867 = vunpack.c.l.b16 %v294
    %v868 = vunpack.c.l.b16 %v295
    %v869 = vunpack.c.l.b16 %v296
    %v870 = vunpack.c.l.b16 %v297
    %v871 = vunpack.c.l.b16 %v298
    %v872 = vunpack.c.l.b16 %v299
    %v873 = vunpack.c.l.b16 %v300
    %v874 = vunpack.c.l.b16 %v301
    %v875 = vunpack.c.l.b16 %v302
    %v876 = vunpack.c.l.b16 %v303
    %v877 = vunpack.c.l.b16 %v304
    %v878 = vunpack.c.l.b16 %v305
    %v879 = vunpack.c.l.b16 %v306
    %v880 = vunpack.c.l.b16 %v307
    %v881 = vunpack.c.l.b16 %v308
    %v882 = vunpack.c.l.b16 %v309
    %v883 = vunpack.c.l.b16 %v310
    %v884 = vunpack.c.l.b16 %v311
    %v885 = vunpack.c.l.b16 %v312
    %v886 = vunpack.c.l.b16 %v313
    %v887 = vunpack.c.l.b16 %v314
    %v888 = vunpack.c.l.b16 %v315
    %v889 = vunpack.c.l.b16 %v316
    %v890 = vunpack.c.l.b16 %v317
    %v891 = vunpack.c.l.b16 %v318
    %v892 = vunpack.c.l.b16 %v319
    %v893 = vunpack.c.l.b16 %v320
    %v894 = vunpack.c.l.b16 %v321
    %v895 = vunpack.c.l.b16 %v322
    %v896 = vunpack.c.l.b16 %v323
    %v897 = vunpack.c.l.b16 %v324
    %v898 = vunpack.c.l.b16 %v325
    %v899 = vunpack.c.l.b16 %v326
    %v900 = vunpack.c.l.b16 %v327
    %v901 = vunpack.c.l.b16 %v328
    %v902 = vunpack.c.l.b16 %v329
    %v903 = vunpack.c.l.b16 %v330
    %v904 = vunpack.c.l.b16 %v331
    %v905 = vunpack.c.l.b16 %v332
    %v906 = vunpack.c.l.b16 %v333
    %v907 = vunpack.c.l.b16 %v334
    %v908 = vunpack.c.l.b16 %v335
    %v909 = vunpack.c.l.b16 %v336
    %v910 = vunpack.c.l.b16 %v337
    %v911 = vunpack.c.l.b16 %v338
    %v912 = vunpack.c.l.b16 %v339
    %v913 = vunpack.c.l.b16 %v340
    %v914 = vunpack.c.l.b16 %v341
    %v915 = vunpack.c.l.b16 %v342
    %v916 = vunpack.c.l.b16 %v343
    %v917 = vunpack.c.l.b16 %v344
    %v918 = vunpack.c.l.b16 %v345
    %v919 = vunpack.c.l.b16 %v346
    %v920 = vunpack.c.l.b16 %v347
    %v921 = vunpack.c.l.b16 %v348
    %v922 = vunpack.c.l.b16 %v349
    %v923 = vunpack.c.l.b16 %v350
    %v924 = vunpack.c.l.b16 %v351
    %v925 = vunpack.c.l.b16 %v352
    %v926 = vunpack.c.l.b16 %v353
    %v927 = vunpack.c.l.b16 %v354
    %v928 = vunpack.c.l.b16 %v355
    %v929 = vunpack.c.l.b16 %v356
    %v930 = vunpack.c.l.b16 %v357
    %v931 = vunpack.c.l.b16 %v358
    %v932 = vunpack.c.l.b16 %v359
    %v933 = vunpack.c.l.b16 %v360
    %v934 = vunpack.c.l.b16 %v361
    %v935 = vunpack.c.l.b16 %v362
    %v936 = vunpack.c.l.b16 %v363
    %v937 = vunpack.c.l.b16 %v364
    %v938 = vunpack.c.l.b16 %v365
    %v939 = vunpack.c.l.b16 %v366
    %v940 = vunpack.c.l.b16 %v367
    %v941 = vunpack.c.l.b16 %v368
    %v942 = vunpack.c.l.b16 %v369
    %v943 = vunpack.c.l.b16 %v370
    %v944 = vunpack.c.l.b16 %v371
    %v945 = vunpack.c.l.b16 %v372
    %v946 = vunpack.c.l.b16 %v373
    %v947 = vunpack.c.l.b16 %v374
    %v948 = vunpack.c.l.b16 %v375
    %v949 = vunpack.c.l.b16 %v376
    %v950 = vunpack.c.l.b16 %v377
    %v951 = vunpack.c.l.b16 %v378
    %v952 = vunpack.c.l.b16 %v379
    %v953 = vunpack.c.l.b16 %v380
    %v954 = vunpack.c.l.b16 %v381
    %v955 = vunpack.c.l.b16 %v382
    %v956 = vunpack.c.l.b16 %v383
    %v957 = vunpack.c.l.b16 %v384
    %v958 = vunpack.c.l.b16 %v385
    %v959 = vunpack.c.l.b16 %v386
    %v960 = vunpack.c.l.b16 %v387
    %v961 = vunpack.c.l.b16 %v388
    %v962 = vunpack.c.l.b16 %v389
    %v963 = vunpack.c.l.b16 %v390
    %v964 = vunpack.c.l.b16 %v391
    %v965 = vpack.c.b16 %v710, %v709
    %v966 = vpack.c.b16 %v712, %v711
    %v967 = vpack.c.b16 %v714, %v713
    %v968 = vpack.c.b16 %v716, %v715
    %v969 = vpack.c.b16 %v718, %v717
    %v970 = vpack.c.b16 %v720, %v719
    %v971 = vpack.c.b16 %v722, %v721
    %v972 = vpack.c.b16 %v724, %v723
    %v973 = vpack.c.b16 %v726, %v725
    %v974 = vpack.c.b16 %v728, %v727
    %v975 = vpack.c.b16 %v730, %v729
    %v976 = vpack.c.b16 %v732, %v731
    %v977 = vpack.c.b16 %v734, %v733
    %v978 = vpack.c.b16 %v736, %v735
    %v979 = vpack.c.b16 %v738, %v737
    %v980 = vpack.c.b16 %v740, %v739
    %v981 = vpack.c.b16 %v742, %v741
    %v982 = vpack.c.b16 %v744, %v743
    %v983 = vpack.c.b16 %v746, %v745
    %v984 = vpack.c.b16 %v748, %v747
    %v985 = vpack.c.b16 %v750, %v749
    %v986 = vpack.c.b16 %v752, %v751
    %v987 = vpack.c.b16 %v754, %v753
    %v988 = vpack.c.b16 %v756, %v755
    %v989 = vpack.c.b16 %v758, %v757
    %v990 = vpack.c.b16 %v760, %v759
    %v991 = vpack.c.b16 %v762, %v761
    %v992 = vpack.c.b16 %v764, %v763
    %v993 = vpack.c.b16 %v766, %v765
    %v994 = vpack.c.b16 %v768, %v767
    %v995 = vpack.c.b16 %v770, %v769
    %v996 = vpack.c.b16 %v772, %v771
    %v997 = vpack.c.b16 %v774, %v773
    %v998 = vpack.c.b16 %v776, %v775
    %v999 = vpack.c.b16 %v778, %v777
    %v1000 = vpack.c.b16 %v780, %v779
    %v1001 = vpack.c.b16 %v782, %v781
    %v1002 = vpack.c.b16 %v784, %v783
    %v1003 = vpack.c.b16 %v786, %v785
    %v1004 = vpack.c.b16 %v788, %v787
    %v1005 = vpack.c.b16 %v790, %v789
    %v1006 = vpack.c.b16 %v792, %v791
    %v1007 = vpack.c.b16 %v794, %v793
    %v1008 = vpack.c.b16 %v796, %v795
    %v1009 = vpack.c.b16 %v798, %v797
    %v1010 = vpack.c.b16 %v800, %v799
    %v1011 = vpack.c.b16 %v802, %v801
    %v1012 = vpack.c.b16 %v804, %v803
    %v1013 = vpack.c.b16 %v806, %v805
    %v1014 = vpack.c.b16 %v808, %v807
    %v1015 = vpack.c.b16 %v810, %v809
    %v1016 = vpack.c.b16 %v812, %v811
    %v1017 = vpack.c.b16 %v814, %v813
    %v1018 = vpack.c.b16 %v816, %v815
    %v1019 = vpack.c.b16 %v818, %v817
    %v1020 = vpack.c.b16 %v820, %v819
    %v1021 = vpack.c.b16 %v822, %v821
    %v1022 = vpack.c.b16 %v824, %v823
    %v1023 = vpack.c.b16 %v826, %v825
    %v1024 = vpack.c.b16 %v828, %v827
    %v1025 = vpack.c.b16 %v830, %v829
    %v1026 = vpack.c.b16 %v832, %v831
    %v1027 = vpack.c.b16 %v834, %v833
    %v1028 = vpack.c.b16 %v836, %v835
    %v1029 = vpack.c.b16 %v838, %v837
    %v1030 = vpack.c.b16 %v840, %v839
    %v1031 = vpack.c.b16 %v842, %v841
    %v1032 = vpack.c.b16 %v844, %v843
    %v1033 = vpack.c.b16 %v846, %v845
    %v1034 = vpack.c.b16 %v848, %v847
    %v1035 = vpack.c.b16 %v850, %v849
    %v1036 = vpack.c.b16 %v852, %v851
    %v1037 = vpack.c.b16 %v854, %v853
    %v1038 = vpack.c.b16 %v856, %v855
    %v1039 = vpack.c.b16 %v858, %v857
    %v1040 = vpack.c.b16 %v860, %v859
    %v1041 = vpack.c.b16 %v862, %v861
    %v1042 = vpack.c.b16 %v864, %v863
    %v1043 = vpack.c.b16 %v866, %v865
    %v1044 = vpack.c.b16 %v868, %v867
    %v1045 = vpack.c.b16 %v870, %v869
    %v1046 = vpack.c.b16 %v872, %v871
    %v1047 = vpack.c.b16 %v874, %v873
    %v1048 = vpack.c.b16 %v876, %v875
    %v1049 = vpack.c.b16 %v878, %v877
    %v1050 = vpack.c.b16 %v880, %v879
    %v1051 = vpack.c.b16 %v882, %v881
    %v1052 = vpack.c.b16 %v884, %v883
    %v1053 = vpack.c.b16 %v886, %v885
    %v1054 = vpack.c.b16 %v888, %v887
    %v1055 = vpack.c.b16 %v890, %v889
    %v1056 = vpack.c.b16 %v892, %v891
    %v1057 = vpack.c.b16 %v894, %v893
    %v1058 = vpack.c.b16 %v896, %v895
    %v1059 = vpack.c.b16 %v898, %v897
    %v1060 = vpack.c.b16 %v900, %v899
    %v1061 = vpack.c.b16 %v902, %v901
    %v1062 = vpack.c.b16 %v904, %v903
    %v1063 = vpack.c.b16 %v906, %v905
    %v1064 = vpack.c.b16 %v908, %v907
    %v1065 = vpack.c.b16 %v910, %v909
    %v1066 = vpack.c.b16 %v912, %v911
    %v1067 = vpack.c.b16 %v914, %v913
    %v1068 = vpack.c.b16 %v916, %v915
    %v1069 = vpack.c.b16 %v918, %v917
    %v1070 = vpack.c.b16 %v920, %v919
    %v1071 = vpack.c.b16 %v922, %v921
    %v1072 = vpack.c.b16 %v924, %v923
    %v1073 = vpack.c.b16 %v926, %v925
    %v1074 = vpack.c.b16 %v928, %v927
    %v1075 = vpack.c.b16 %v930, %v929
    %v1076 = vpack.c.b16 %v932, %v931
    %v1077 = vpack.c.b16 %v934, %v933
    %v1078 = vpack.c.b16 %v936, %v935
    %v1079 = vpack.c.b16 %v938, %v937
    %v1080 = vpack.c.b16 %v940, %v939
    %v1081 = vpack.c.b16 %v942, %v941
    %v1082 = vpack.c.b16 %v944, %v943
    %v1083 = vpack.c.b16 %v946, %v945
    %v1084 = vpack.c.b16 %v948, %v947
    %v1085 = vpack.c.b16 %v950, %v949
    %v1086 = vpack.c.b16 %v952, %v951
    %v1087 = vpack.c.b16 %v954, %v953
    %v1088 = vpack.c.b16 %v956, %v955
    %v1089 = vpack.c.b16 %v958, %v957
    %v1090 = vpack.c.b16 %v960, %v959
    %v1091 = vpack.c.b16 %v962, %v961
    %v1092 = vpack.c.b16 %v964, %v963
    %1221 = vmatprep.subr.bf16.mxu0 0
    %1222 = vmatpush1.bf16.msra.mxu0 %v965
    %1223 = vmatprep.subr.bf16.mxu0 0
    %1224 = vmatpush1.bf16.msra.mxu0 %v966
    %1225 = vmatprep.subr.bf16.mxu0 0
    %1226 = vmatpush1.bf16.msra.mxu0 %v967
    %1227 = vmatprep.subr.bf16.mxu0 0
    %1228 = vmatpush1.bf16.msra.mxu0 %v968
    %1229 = vmatprep.subr.bf16.mxu0 0
    %1230 = vmatpush1.bf16.msra.mxu0 %v969
    %1231 = vmatprep.subr.bf16.mxu0 0
    %1232 = vmatpush1.bf16.msra.mxu0 %v970
    %1233 = vmatprep.subr.bf16.mxu0 0
    %1234 = vmatpush1.bf16.msra.mxu0 %v971
    %1235 = vmatprep.subr.bf16.mxu0 0
    %1236 = vmatpush1.bf16.msra.mxu0 %v972
    %1237 = vmatprep.subr.bf16.mxu0 0
    %1238 = vmatpush1.bf16.msra.mxu0 %v973
    %1239 = vmatprep.subr.bf16.mxu0 0
    %1240 = vmatpush1.bf16.msra.mxu0 %v974
    %1241 = vmatprep.subr.bf16.mxu0 0
    %1242 = vmatpush1.bf16.msra.mxu0 %v975
    %1243 = vmatprep.subr.bf16.mxu0 0
    %1244 = vmatpush1.bf16.msra.mxu0 %v976
    %1245 = vmatprep.subr.bf16.mxu0 0
    %1246 = vmatpush1.bf16.msra.mxu0 %v977
    %1247 = vmatprep.subr.bf16.mxu0 0
    %1248 = vmatpush1.bf16.msra.mxu0 %v978
    %1249 = vmatprep.subr.bf16.mxu0 0
    %1250 = vmatpush1.bf16.msra.mxu0 %v979
    %1251 = vmatprep.subr.bf16.mxu0 0
    %1252 = vmatpush1.bf16.msra.mxu0 %v980
    %1253 = vmatprep.mubr.bf16.mxu0 %v422
    %1254 = vmatmul.mubr.bf16.gmra.mrb[0].mxu0 %v421
    %v1255 = vpop.f32.mrb[0].mxu0
    %v1256 = vadd.f32 %v396, %v1255
    %v1257 = vpop.f32.mrb[0].mxu0
    %v1258 = vpop.f32.mrb[0].mxu0
    %v1259 = vpop.f32.mrb[0].mxu0
    %1260 = vdwg.mxu0
    %1261 = vmatprep.subr.bf16.mxu0 0
    %1262 = vmatpush1.bf16.msra.mxu0 %v981
    %1263 = vmatprep.subr.bf16.mxu0 0
    %1264 = vmatpush1.bf16.msra.mxu0 %v982
    %1265 = vmatprep.subr.bf16.mxu0 0
    %1266 = vmatpush1.bf16.msra.mxu0 %v983
    %1267 = vmatprep.subr.bf16.mxu0 0
    %1268 = vmatpush1.bf16.msra.mxu0 %v984
    %1269 = vmatprep.subr.bf16.mxu0 0
    %1270 = vmatpush1.bf16.msra.mxu0 %v985
    %1271 = vmatprep.subr.bf16.mxu0 0
    %1272 = vmatpush1.bf16.msra.mxu0 %v986
    %1273 = vmatprep.subr.bf16.mxu0 0
    %1274 = vmatpush1.bf16.msra.mxu0 %v987
    %1275 = vmatprep.subr.bf16.mxu0 0
    %1276 = vmatpush1.bf16.msra.mxu0 %v988
    %1277 = vmatprep.subr.bf16.mxu0 0
    %1278 = vmatpush1.bf16.msra.mxu0 %v989
    %1279 = vmatprep.subr.bf16.mxu0 0
    %1280 = vmatpush1.bf16.msra.mxu0 %v990
    %1281 = vmatprep.subr.bf16.mxu0 0
    %1282 = vmatpush1.bf16.msra.mxu0 %v991
    %1283 = vmatprep.subr.bf16.mxu0 0
    %1284 = vmatpush1.bf16.msra.mxu0 %v992
    %1285 = vmatprep.subr.bf16.mxu0 0
    %1286 = vmatpush1.bf16.msra.mxu0 %v993
    %1287 = vmatprep.subr.bf16.mxu0 0
    %1288 = vmatpush1.bf16.msra.mxu0 %v994
    %1289 = vmatprep.subr.bf16.mxu0 0
    %1290 = vmatpush1.bf16.msra.mxu0 %v995
    %1291 = vmatprep.subr.bf16.mxu0 0
    %1292 = vmatpush1.bf16.msra.mxu0 %v996
    %1293 = vmatprep.mubr.bf16.mxu0 %v424
    %1294 = vmatmul.mubr.bf16.gmra.mrb[0].mxu0 %v423
    %v1295 = vpop.f32.mrb[0].mxu0
    %v1296 = vadd.f32 %v1256, %v1295
    %v1297 = vpop.f32.mrb[0].mxu0
    %v1298 = vpop.f32.mrb[0].mxu0
    %v1299 = vpop.f32.mrb[0].mxu0
    %1300 = vdwg.mxu0
    %1301 = vmatprep.subr.bf16.mxu0 0
    %1302 = vmatpush1.bf16.msra.mxu0 %v997
    %1303 = vmatprep.subr.bf16.mxu0 0
    %1304 = vmatpush1.bf16.msra.mxu0 %v998
    %1305 = vmatprep.subr.bf16.mxu0 0
    %1306 = vmatpush1.bf16.msra.mxu0 %v999
    %1307 = vmatprep.subr.bf16.mxu0 0
    %1308 = vmatpush1.bf16.msra.mxu0 %v1000
    %1309 = vmatprep.subr.bf16.mxu0 0
    %1310 = vmatpush1.bf16.msra.mxu0 %v1001
    %1311 = vmatprep.subr.bf16.mxu0 0
    %1312 = vmatpush1.bf16.msra.mxu0 %v1002
    %1313 = vmatprep.subr.bf16.mxu0 0
    %1314 = vmatpush1.bf16.msra.mxu0 %v1003
    %1315 = vmatprep.subr.bf16.mxu0 0
    %1316 = vmatpush1.bf16.msra.mxu0 %v1004
    %1317 = vmatprep.subr.bf16.mxu0 0
    %1318 = vmatpush1.bf16.msra.mxu0 %v1005
    %1319 = vmatprep.subr.bf16.mxu0 0
    %1320 = vmatpush1.bf16.msra.mxu0 %v1006
    %1321 = vmatprep.subr.bf16.mxu0 0
    %1322 = vmatpush1.bf16.msra.mxu0 %v1007
    %1323 = vmatprep.subr.bf16.mxu0 0
    %1324 = vmatpush1.bf16.msra.mxu0 %v1008
    %1325 = vmatprep.subr.bf16.mxu0 0
    %1326 = vmatpush1.bf16.msra.mxu0 %v1009
    %1327 = vmatprep.subr.bf16.mxu0 0
    %1328 = vmatpush1.bf16.msra.mxu0 %v1010
    %1329 = vmatprep.subr.bf16.mxu0 0
    %1330 = vmatpush1.bf16.msra.mxu0 %v1011
    %1331 = vmatprep.subr.bf16.mxu0 0
    %1332 = vmatpush1.bf16.msra.mxu0 %v1012
    %1333 = vmatprep.mubr.bf16.mxu0 %v426
    %1334 = vmatmul.mubr.bf16.gmra.mrb[0].mxu0 %v425
    %v1335 = vpop.f32.mrb[0].mxu0
    %v1336 = vadd.f32 %v1296, %v1335
    %v1337 = vpop.f32.mrb[0].mxu0
    %v1338 = vpop.f32.mrb[0].mxu0
    %v1339 = vpop.f32.mrb[0].mxu0
    %1340 = vdwg.mxu0
    %1341 = vmatprep.subr.bf16.mxu0 0
    %1342 = vmatpush1.bf16.msra.mxu0 %v1013
    %1343 = vmatprep.subr.bf16.mxu0 0
    %1344 = vmatpush1.bf16.msra.mxu0 %v1014
    %1345 = vmatprep.subr.bf16.mxu0 0
    %1346 = vmatpush1.bf16.msra.mxu0 %v1015
    %1347 = vmatprep.subr.bf16.mxu0 0
    %1348 = vmatpush1.bf16.msra.mxu0 %v1016
    %1349 = vmatprep.subr.bf16.mxu0 0
    %1350 = vmatpush1.bf16.msra.mxu0 %v1017
    %1351 = vmatprep.subr.bf16.mxu0 0
    %1352 = vmatpush1.bf16.msra.mxu0 %v1018
    %1353 = vmatprep.subr.bf16.mxu0 0
    %1354 = vmatpush1.bf16.msra.mxu0 %v1019
    %1355 = vmatprep.subr.bf16.mxu0 0
    %1356 = vmatpush1.bf16.msra.mxu0 %v1020
    %1357 = vmatprep.subr.bf16.mxu0 0
    %1358 = vmatpush1.bf16.msra.mxu0 %v1021
    %1359 = vmatprep.subr.bf16.mxu0 0
    %1360 = vmatpush1.bf16.msra.mxu0 %v1022
    %1361 = vmatprep.subr.bf16.mxu0 0
    %1362 = vmatpush1.bf16.msra.mxu0 %v1023
    %1363 = vmatprep.subr.bf16.mxu0 0
    %1364 = vmatpush1.bf16.msra.mxu0 %v1024
    %1365 = vmatprep.subr.bf16.mxu0 0
    %1366 = vmatpush1.bf16.msra.mxu0 %v1025
    %1367 = vmatprep.subr.bf16.mxu0 0
    %1368 = vmatpush1.bf16.msra.mxu0 %v1026
    %1369 = vmatprep.subr.bf16.mxu0 0
    %1370 = vmatpush1.bf16.msra.mxu0 %v1027
    %1371 = vmatprep.subr.bf16.mxu0 0
    %1372 = vmatpush1.bf16.msra.mxu0 %v1028
    %1373 = vmatprep.mubr.bf16.mxu0 %v428
    %1374 = vmatmul.mubr.bf16.gmra.mrb[0].mxu0 %v427
    %v1375 = vpop.f32.mrb[0].mxu0
    %v1376 = vadd.f32 %v1336, %v1375
    %v1377 = vpop.f32.mrb[0].mxu0
    %v1378 = vpop.f32.mrb[0].mxu0
    %v1379 = vpop.f32.mrb[0].mxu0
    %1380 = vdwg.mxu0
    %1381 = vmatprep.subr.bf16.mxu0 0
    %1382 = vmatpush1.bf16.msra.mxu0 %v1029
    %1383 = vmatprep.subr.bf16.mxu0 0
    %1384 = vmatpush1.bf16.msra.mxu0 %v1030
    %1385 = vmatprep.subr.bf16.mxu0 0
    %1386 = vmatpush1.bf16.msra.mxu0 %v1031
    %1387 = vmatprep.subr.bf16.mxu0 0
    %1388 = vmatpush1.bf16.msra.mxu0 %v1032
    %1389 = vmatprep.subr.bf16.mxu0 0
    %1390 = vmatpush1.bf16.msra.mxu0 %v1033
    %1391 = vmatprep.subr.bf16.mxu0 0
    %1392 = vmatpush1.bf16.msra.mxu0 %v1034
    %1393 = vmatprep.subr.bf16.mxu0 0
    %1394 = vmatpush1.bf16.msra.mxu0 %v1035
    %1395 = vmatprep.subr.bf16.mxu0 0
    %1396 = vmatpush1.bf16.msra.mxu0 %v1036
    %1397 = vmatprep.subr.bf16.mxu0 0
    %1398 = vmatpush1.bf16.msra.mxu0 %v1037
    %1399 = vmatprep.subr.bf16.mxu0 0
    %1400 = vmatpush1.bf16.msra.mxu0 %v1038
    %1401 = vmatprep.subr.bf16.mxu0 0
    %1402 = vmatpush1.bf16.msra.mxu0 %v1039
    %1403 = vmatprep.subr.bf16.mxu0 0
    %1404 = vmatpush1.bf16.msra.mxu0 %v1040
    %1405 = vmatprep.subr.bf16.mxu0 0
    %1406 = vmatpush1.bf16.msra.mxu0 %v1041
    %1407 = vmatprep.subr.bf16.mxu0 0
    %1408 = vmatpush1.bf16.msra.mxu0 %v1042
    %1409 = vmatprep.subr.bf16.mxu0 0
    %1410 = vmatpush1.bf16.msra.mxu0 %v1043
    %1411 = vmatprep.subr.bf16.mxu0 0
    %1412 = vmatpush1.bf16.msra.mxu0 %v1044
    %1413 = vmatprep.mubr.bf16.mxu0 %v430
    %1414 = vmatmul.mubr.bf16.gmra.mrb[0].mxu0 %v429
    %v1415 = vpop.f32.mrb[0].mxu0
    %v1416 = vadd.f32 %v1376, %v1415
    %v1417 = vpop.f32.mrb[0].mxu0
    %v1418 = vpop.f32.mrb[0].mxu0
    %v1419 = vpop.f32.mrb[0].mxu0
    %1420 = vdwg.mxu0
    %1421 = vmatprep.subr.bf16.mxu0 0
    %1422 = vmatpush1.bf16.msra.mxu0 %v1045
    %1423 = vmatprep.subr.bf16.mxu0 0
    %1424 = vmatpush1.bf16.msra.mxu0 %v1046
    %1425 = vmatprep.subr.bf16.mxu0 0
    %1426 = vmatpush1.bf16.msra.mxu0 %v1047
    %1427 = vmatprep.subr.bf16.mxu0 0
    %1428 = vmatpush1.bf16.msra.mxu0 %v1048
    %1429 = vmatprep.subr.bf16.mxu0 0
    %1430 = vmatpush1.bf16.msra.mxu0 %v1049
    %1431 = vmatprep.subr.bf16.mxu0 0
    %1432 = vmatpush1.bf16.msra.mxu0 %v1050
    %1433 = vmatprep.subr.bf16.mxu0 0
    %1434 = vmatpush1.bf16.msra.mxu0 %v1051
    %1435 = vmatprep.subr.bf16.mxu0 0
    %1436 = vmatpush1.bf16.msra.mxu0 %v1052
    %1437 = vmatprep.subr.bf16.mxu0 0
    %1438 = vmatpush1.bf16.msra.mxu0 %v1053
    %1439 = vmatprep.subr.bf16.mxu0 0
    %1440 = vmatpush1.bf16.msra.mxu0 %v1054
    %1441 = vmatprep.subr.bf16.mxu0 0
    %1442 = vmatpush1.bf16.msra.mxu0 %v1055
    %1443 = vmatprep.subr.bf16.mxu0 0
    %1444 = vmatpush1.bf16.msra.mxu0 %v1056
    %1445 = vmatprep.subr.bf16.mxu0 0
    %1446 = vmatpush1.bf16.msra.mxu0 %v1057
    %1447 = vmatprep.subr.bf16.mxu0 0
    %1448 = vmatpush1.bf16.msra.mxu0 %v1058
    %1449 = vmatprep.subr.bf16.mxu0 0
    %1450 = vmatpush1.bf16.msra.mxu0 %v1059
    %1451 = vmatprep.subr.bf16.mxu0 0
    %1452 = vmatpush1.bf16.msra.mxu0 %v1060
    %1453 = vmatprep.mubr.bf16.mxu0 %v432
    %1454 = vmatmul.mubr.bf16.gmra.mrb[0].mxu0 %v431
    %v1455 = vpop.f32.mrb[0].mxu0
    %v1456 = vadd.f32 %v1416, %v1455
    %v1457 = vpop.f32.mrb[0].mxu0
    %v1458 = vpop.f32.mrb[0].mxu0
    %v1459 = vpop.f32.mrb[0].mxu0
    %1460 = vdwg.mxu0
    %1461 = vmatprep.subr.bf16.mxu0 0
    %1462 = vmatpush1.bf16.msra.mxu0 %v1061
    %1463 = vmatprep.subr.bf16.mxu0 0
    %1464 = vmatpush1.bf16.msra.mxu0 %v1062
    %1465 = vmatprep.subr.bf16.mxu0 0
    %1466 = vmatpush1.bf16.msra.mxu0 %v1063
    %1467 = vmatprep.subr.bf16.mxu0 0
    %1468 = vmatpush1.bf16.msra.mxu0 %v1064
    %1469 = vmatprep.subr.bf16.mxu0 0
    %1470 = vmatpush1.bf16.msra.mxu0 %v1065
    %1471 = vmatprep.subr.bf16.mxu0 0
    %1472 = vmatpush1.bf16.msra.mxu0 %v1066
    %1473 = vmatprep.subr.bf16.mxu0 0
    %1474 = vmatpush1.bf16.msra.mxu0 %v1067
    %1475 = vmatprep.subr.bf16.mxu0 0
    %1476 = vmatpush1.bf16.msra.mxu0 %v1068
    %1477 = vmatprep.subr.bf16.mxu0 0
    %1478 = vmatpush1.bf16.msra.mxu0 %v1069
    %1479 = vmatprep.subr.bf16.mxu0 0
    %1480 = vmatpush1.bf16.msra.mxu0 %v1070
    %1481 = vmatprep.subr.bf16.mxu0 0
    %1482 = vmatpush1.bf16.msra.mxu0 %v1071
    %1483 = vmatprep.subr.bf16.mxu0 0
    %1484 = vmatpush1.bf16.msra.mxu0 %v1072
    %1485 = vmatprep.subr.bf16.mxu0 0
    %1486 = vmatpush1.bf16.msra.mxu0 %v1073
    %1487 = vmatprep.subr.bf16.mxu0 0
    %1488 = vmatpush1.bf16.msra.mxu0 %v1074
    %1489 = vmatprep.subr.bf16.mxu0 0
    %1490 = vmatpush1.bf16.msra.mxu0 %v1075
    %1491 = vmatprep.subr.bf16.mxu0 0
    %1492 = vmatpush1.bf16.msra.mxu0 %v1076
    %1493 = vmatprep.mubr.bf16.mxu0 %v434
    %1494 = vmatmul.mubr.bf16.gmra.mrb[0].mxu0 %v433
    %v1495 = vpop.f32.mrb[0].mxu0
    %v1496 = vadd.f32 %v1456, %v1495
    %v1497 = vpop.f32.mrb[0].mxu0
    %v1498 = vpop.f32.mrb[0].mxu0
    %v1499 = vpop.f32.mrb[0].mxu0
    %1500 = vdwg.mxu0
    %1501 = vmatprep.subr.bf16.mxu0 0
    %1502 = vmatpush1.bf16.msra.mxu0 %v1077
    %1503 = vmatprep.subr.bf16.mxu0 0
    %1504 = vmatpush1.bf16.msra.mxu0 %v1078
    %1505 = vmatprep.subr.bf16.mxu0 0
    %1506 = vmatpush1.bf16.msra.mxu0 %v1079
    %1507 = vmatprep.subr.bf16.mxu0 0
    %1508 = vmatpush1.bf16.msra.mxu0 %v1080
    %1509 = vmatprep.subr.bf16.mxu0 0
    %1510 = vmatpush1.bf16.msra.mxu0 %v1081
    %1511 = vmatprep.subr.bf16.mxu0 0
    %1512 = vmatpush1.bf16.msra.mxu0 %v1082
    %1513 = vmatprep.subr.bf16.mxu0 0
    %1514 = vmatpush1.bf16.msra.mxu0 %v1083
    %1515 = vmatprep.subr.bf16.mxu0 0
    %1516 = vmatpush1.bf16.msra.mxu0 %v1084
    %1517 = vmatprep.subr.bf16.mxu0 0
    %1518 = vmatpush1.bf16.msra.mxu0 %v1085
    %1519 = vmatprep.subr.bf16.mxu0 0
    %1520 = vmatpush1.bf16.msra.mxu0 %v1086
    %1521 = vmatprep.subr.bf16.mxu0 0
    %1522 = vmatpush1.bf16.msra.mxu0 %v1087
    %1523 = vmatprep.subr.bf16.mxu0 0
    %1524 = vmatpush1.bf16.msra.mxu0 %v1088
    %1525 = vmatprep.subr.bf16.mxu0 0
    %1526 = vmatpush1.bf16.msra.mxu0 %v1089
    %1527 = vmatprep.subr.bf16.mxu0 0
    %1528 = vmatpush1.bf16.msra.mxu0 %v1090
    %1529 = vmatprep.subr.bf16.mxu0 0
    %1530 = vmatpush1.bf16.msra.mxu0 %v1091
    %1531 = vmatprep.subr.bf16.mxu0 0
    %1532 = vmatpush1.bf16.msra.mxu0 %v1092
    %1533 = vmatprep.mubr.bf16.mxu0 %v436
    %1534 = vmatmul.mubr.bf16.gmra.mrb[0].mxu0 %v435
    %v1535 = vpop.f32.mrb[0].mxu0
    %v1536 = vadd.f32 %v1496, %v1535
    %v1537 = vpop.f32.mrb[0].mxu0
    %v1538 = vpop.f32.mrb[0].mxu0
    %v1539 = vpop.f32.mrb[0].mxu0
    %1540 = vdwg.mxu0
    %1541 = vadd.xlane.f32.xlu0 %v1536
    %v1542 = vpop.xlane.xlu0 %1541
    %v1543 = vmul.f32 %v1542, 0.03125
    %v1544 = vmul.f32 %v1536, %v1536
    %1545 = vadd.xlane.f32.xlu0 %v1544
    %v1546 = vpop.xlane.xlu0 %1545
    %v1547 = vmul.f32 %v1546, 0.03125
    %v1548 = vmul.f32 %v1543, %v1543
    %v1549 = vsub.f32 %v1547, %v1548
    %v1550 = vmax.f32 %v1549, 0.0
    %v1551 = vadd.f32 %v1550, 1e-05
    %v1552 = vrsqrt.pop %v1551
    %v1553 = vsub.f32 %v1536, %v1543
    %v1554 = vmul.f32 %v1553, %v1552
    %v1555 = vlaneseq
    %v1556 = vshrl.u32 %v1555, 7
    %v1557 = vsub.s32 1, %v1556
    %v1558 = vrot.slane %v392, %v1557
    %v1559 = vmul.f32 %v1554, %v1558
    %v1560 = vlaneseq
    %v1561 = vshrl.u32 %v1560, 7
    %v1562 = vsub.s32 2, %v1561
    %v1563 = vrot.slane %v392, %v1562
    %v1564 = vadd.f32 %v1559, %v1563
    %1565 = vst [vmem:[%s4] sm:$0xff] %v1564
    // Predicated region
    $region22: #{simple_fsp_enc_forward.1} parent=1 // pred_check
      _
    $region23: #{simple_fsp_enc_forward.1} parent=1 // pred_check_branch
      %1567 = sbr.rel (0) target = $region25
    $region24: #{simple_fsp_enc_forward.1} parent=1 // pred_region
      _
    $region25: #{simple_fsp_enc_forward.1} parent=1 // pred_fallthru
      _
    // Predicated region
    $region26: #{simple_fsp_enc_forward.1} parent=1 // pred_check
      _
    $region27: #{simple_fsp_enc_forward.1} parent=1 // pred_check_branch
      %1569 = sbr.rel (0) target = $region29
    $region28: #{simple_fsp_enc_forward.1} parent=1 // pred_region
      _
    $region29: #{simple_fsp_enc_forward.1} parent=1 // pred_fallthru
      _
    %1570 = vsyncpa [#allocation4], 1

</llo_original>
